<compile_context>
chip_gen: v6e
topology: v6e:2x2x1
jax: 0.10.0
libtpu: 0.0.40
codegen_flags: <defaults>
</compile_context>

<pallas_src>
import functools

import jax
import jax.numpy as jnp
from jax.experimental import pallas as pl
from jax.experimental.pallas import tpu as pltpu


def _channel_gate_kernel(x_ref, w1t_ref, b1_ref, w2t_ref, b2_ref, o_ref, *, use_mxu):
    # x_ref : (nb, C, HW)  nb images per grid step (C on sublanes, HW on lanes)
    # w1t_ref: (C, Cr)   b1_ref: (1, Cr)    (first Linear, pre-transposed)
    # w2t_ref: (Cr, C)   b2_ref: (1, C)     (second Linear, pre-transposed)
    nb, c, hw = x_ref.shape
    x = x_ref[...]                                        # native dtype, no upcast copy

    # ---- global pools over the spatial (lane) axis ---------------------------
    mx = jnp.max(x, axis=-1).astype(jnp.float32)          # (nb, C)  XLU reduce, exact

    if use_mxu:
        # sum / sum-of-squares on the MXU against a ones column; operands stay in
        # the native (sub-32-bit) dtype, accumulation is f32.  The elementwise
        # square for bf16 is done in bf16 (half-size temp; tolerance documented).
        ones = jnp.ones((hw, 1), x.dtype)
        x2d = x.reshape(nb * c, hw)
        s = jnp.dot(x2d, ones,
                    preferred_element_type=jnp.float32).reshape(nb, c)
        sq = jnp.dot(x2d * x2d, ones,
                     preferred_element_type=jnp.float32).reshape(nb, c)
    else:
        # f32 (and any unaligned) path: exact f32 VPU/XLU reductions.
        xf = x.astype(jnp.float32)
        s = jnp.sum(xf, axis=-1)                          # (nb, C)
        sq = jnp.sum(xf * xf, axis=-1)                    # (nb, C)

    avg = s * (1.0 / hw)                                  # F.avg_pool2d
    lp = jnp.sqrt(sq)                                     # F.lp_pool2d, p=2

    # ---- shared MLP, batched over the nb images of the block -----------------
    w1t = w1t_ref[...]
    b1 = b1_ref[...]
    w2t = w2t_ref[...]
    b2 = b2_ref[...]

    def hidden(p):                                        # p: (nb, C) f32
        return jnp.maximum(
            jnp.dot(p, w1t, preferred_element_type=jnp.float32) + b1, 0.0)

    # Exact fusion of the second Linear over the three pool types:
    #   sum_p (W2 relu(W1 p + b1) + b2) == W2 (sum_p relu(W1 p + b1)) + 3 b2
    h = hidden(avg) + hidden(mx) + hidden(lp)             # (nb, Cr)
    att = jnp.dot(h, w2t, preferred_element_type=jnp.float32) + 3.0 * b2  # (nb, C)
    scale = jax.nn.sigmoid(att)                           # (nb, C) f32

    # ---- gate: one lane-dense store for the whole block ----------------------
    o_ref[...] = (x * scale[:, :, None].astype(x.dtype)).astype(o_ref.dtype)


def _tpu_budget():
    """(vmem_capacity_bytes, tensorcores_per_chip) with conservative fallbacks."""
    vmem_cap = 64 << 20            # v7x per-TC value: safe lower bound
    n_tc = 2                       # conservative: assume megacore-style split
    kind = ""
    try:
        kind = jax.devices()[0].device_kind.lower()
    except Exception:
        pass
    single_tc = any(tag in kind for tag in
                    ("v5 lite", "v5e", "v5litepod", "v6 lite", "v6e"))
    try:
        info = pltpu.get_tpu_info()
        vmem_cap = int(getattr(info, "vmem_capacity_bytes", vmem_cap)) or vmem_cap
    except Exception:
        if single_tc:
            vmem_cap = 128 << 20
    if single_tc:
        n_tc = 1
    return vmem_cap, n_tc


def channel_gate(x, w1, b1, w2, b2, *, target_block_bytes=None, max_imgs_per_block=32):
    """x: (N, C, H, W); weights in PyTorch nn.Linear layout (w1: (Cr,C), w2: (C,Cr))."""
    N, C, H, W = x.shape
    HW = H * W
    Cr = w1.shape[0]
    itemsize = jnp.dtype(x.dtype).itemsize

    vmem_cap, n_tc = _tpu_budget()
    if target_block_bytes is None:
        # bigger blocks on single-TC / 128 MiB-VMEM parts (v5e/v6e), smaller on v7x
        target_block_bytes = (6 << 20) if (n_tc == 1 and vmem_cap >= (96 << 20)) else (2 << 20)

    per_img_io = C * HW * itemsize
    # VMEM per extra image: double-buffered in + out blocks plus in-kernel temps
    # (worst case f32: x*x and the gated product before the store).
    per_img_vmem = 4 * per_img_io + 2 * C * HW * 4
    w_bytes = 4 * (2 * C * Cr + C + Cr)
    fixed_vmem = 2 * w_bytes + (2 << 20)                  # resident weights + headroom
    usable = max(vmem_cap - (16 << 20), 16 << 20)

    # --- pick nb (images per grid step) ---------------------------------------
    nb_bytes = max(1, target_block_bytes // per_img_io)
    min_steps = min(N, 8 if n_tc >= 2 else 4)             # >= 4 pipelined steps per TC
    nb_steps = max(1, N // max(min_steps, 1))
    nb_vmem = max(1, (usable - fixed_vmem) // per_img_vmem) if usable > fixed_vmem else 1
    nb_target = int(max(1, min(nb_bytes, nb_steps, nb_vmem, max_imgs_per_block, N)))

    nb = 1
    for d in range(nb_target, 0, -1):                      # largest divisor of N <= target
        if N % d == 0:
            nb = d
            break
    grid_n = N // nb

    # Never clamp the limit below the estimate; block size shrinks instead.
    vmem_est = 4 * nb * per_img_io + 2 * nb * C * HW * 4 + fixed_vmem
    vmem_limit = int(min(max(vmem_est, 32 << 20), vmem_cap - (8 << 20)))
    # TODO(synk): HW-chunked two-pass variant for C*HW blocks that exceed VMEM even at nb=1.

    # MXU pooling only for sub-32-bit inputs on tile-aligned shapes (keeps the
    # f32 path on exact VPU/XLU sums and avoids layout-forcing reshapes).
    sublane_pack = (4 // max(itemsize, 1)) * 8
    use_mxu = (x.dtype != jnp.float32) and (HW % 128 == 0) and (C % sublane_pack == 0)

    xf = x.reshape(N, C, HW)                               # free reshape: no pad, no copy
    w1t = w1.astype(jnp.float32).T                         # (C, Cr)
    w2t = w2.astype(jnp.float32).T                         # (Cr, C)
    b1r = b1.astype(jnp.float32).reshape(1, Cr)
    b2r = b2.astype(jnp.float32).reshape(1, C)

    cost = pl.CostEstimate(
        flops=int(6 * N * C * HW + 12 * N * C * Cr + 4 * N * C),
        transcendentals=int(2 * N * C),
        bytes_accessed=int(2 * N * C * HW * itemsize + w_bytes),
    )

    kernel = functools.partial(_channel_gate_kernel, use_mxu=use_mxu)

    out = pl.pallas_call(
        kernel,
        out_shape=jax.ShapeDtypeStruct((N, C, HW), x.dtype),
        grid_spec=pltpu.PrefetchScalarGridSpec(
            num_scalar_prefetch=0,
            grid=(grid_n,),
            in_specs=[
                pl.BlockSpec((nb, C, HW), lambda n: (n, 0, 0)),   # full (C, HW) extents
                pl.BlockSpec((C, Cr), lambda n: (0, 0)),          # weights stay resident
                pl.BlockSpec((1, Cr), lambda n: (0, 0)),
                pl.BlockSpec((Cr, C), lambda n: (0, 0)),
                pl.BlockSpec((1, C), lambda n: (0, 0)),
            ],
            out_specs=pl.BlockSpec((nb, C, HW), lambda n: (n, 0, 0)),
        ),
        compiler_params=pltpu.CompilerParams(
            dimension_semantics=("parallel",),
            vmem_limit_bytes=vmem_limit,
        ),
        cost_estimate=cost,
    )(xf, w1t, b1r, w2t, b2r)

    return out.reshape(N, C, H, W)


def _reference(x, w1, b1, w2, b2):
    N, C, H, W = x.shape
    xf = x.reshape(N, C, H * W)
    avg = jnp.mean(xf, axis=-1)
    mx = jnp.max(xf, axis=-1)
    lp = jnp.sqrt(jnp.sum(xf * xf, axis=-1))

    def mlp(p):
        return jnp.maximum(p @ w1.T + b1, 0.0) @ w2.T + b2

    att = mlp(avg) + mlp(mx) + mlp(lp)
    scale = jax.nn.sigmoid(att)[:, :, None, None]
    return x * scale


if __name__ == "__main__":
    # gate_channels must be divisible by reduction_ratio (=16).
    N, C, H, W = 4, 64, 16, 16
    reduction_ratio = 16
    Cr = C // reduction_ratio

    key = jax.random.PRNGKey(0)
    kx, k1, kb1, k2, kb2 = jax.random.split(key, 5)

    x = jax.random.normal(kx, (N, C, H, W), dtype=jnp.float32)

    # Deterministic parameter init (PyTorch Linear-style uniform bounds).
    bound1 = 1.0 / jnp.sqrt(C)
    w1 = jax.random.uniform(k1, (Cr, C), jnp.float32, -bound1, bound1)
    b1 = jax.random.uniform(kb1, (Cr,), jnp.float32, -bound1, bound1)
    bound2 = 1.0 / jnp.sqrt(Cr)
    w2 = jax.random.uniform(k2, (C, Cr), jnp.float32, -bound2, bound2)
    b2 = jax.random.uniform(kb2, (C,), jnp.float32, -bound2, bound2)

    # f32 path (exact f32 VPU/XLU pooling)
    out = jax.block_until_ready(channel_gate(x, w1, b1, w2, b2))
    ref = _reference(x, w1, b1, w2, b2)
    assert out.shape == (N, C, H, W)
    assert jnp.allclose(out, ref, atol=1e-4, rtol=1e-4), "f32 mismatch vs reference"

    # bf16 I/O path (MXU pooling with bf16 operands, f32 accumulation; bf16 gate mul)
    x_bf = x.astype(jnp.bfloat16)
    out_bf = jax.block_until_ready(channel_gate(x_bf, w1, b1, w2, b2))
    ref_bf = _reference(x_bf.astype(jnp.float32), w1, b1, w2, b2)
    assert out_bf.dtype == jnp.bfloat16
    assert jnp.allclose(out_bf.astype(jnp.float32), ref_bf, atol=5e-2, rtol=5e-2), \
        "bf16 mismatch vs reference"

    # odd shapes: HW not a multiple of 128, prime N -> nb=1, full-extent block, no padding
    N2, C2, H2, W2, r2 = 3, 32, 5, 7, 8
    k = jax.random.PRNGKey(1)
    kx2, k21, k2b1, k22, k2b2 = jax.random.split(k, 5)
    x2 = jax.random.normal(kx2, (N2, C2, H2, W2), dtype=jnp.float32)
    Cr2 = C2 // r2
    w1b = jax.random.uniform(k21, (Cr2, C2), jnp.float32, -0.2, 0.2)
    b1b = jax.random.uniform(k2b1, (Cr2,), jnp.float32, -0.2, 0.2)
    w2b = jax.random.uniform(k22, (C2, Cr2), jnp.float32, -0.2, 0.2)
    b2b = jax.random.uniform(k2b2, (C2,), jnp.float32, -0.2, 0.2)
    out2 = jax.block_until_ready(channel_gate(x2, w1b, b1b, w2b, b2b))
    ref2 = _reference(x2, w1b, b1b, w2b, b2b)
    assert jnp.allclose(out2, ref2, atol=1e-4, rtol=1e-4), "odd-shape mismatch vs reference"

    print("KERNEL_OK")
</pallas_src>

<mosaic_0001>
module attributes {stable_mosaic.version = 11 : i64} {
  func.func @_channel_gate_kernel(%arg0: i32, %arg1: memref<1x64x256xf32, #tpu.memory_space<vmem>>, %arg2: memref<64x4xf32, #tpu.memory_space<vmem>>, %arg3: memref<1x4xf32, #tpu.memory_space<vmem>>, %arg4: memref<4x64xf32, #tpu.memory_space<vmem>>, %arg5: memref<1x64xf32, #tpu.memory_space<vmem>>, %arg6: memref<1x64x256xf32, #tpu.memory_space<vmem>>) attributes {dimension_semantics = [#tpu.dimension_semantics<parallel>], iteration_bounds = array<i64: 4>, scalar_prefetch = 0 : i64, scratch_operands = 0 : i64, tpu.core_type = #tpu.core_type<tc>, window_params = [{transform_indices = @transform_0, window_bounds = array<i64: 1, 64, 256>}, {pipeline_mode = #tpu.pipeline_mode<synchronous>, transform_indices = @transform_1, window_bounds = array<i64: 64, 4>}, {pipeline_mode = #tpu.pipeline_mode<synchronous>, transform_indices = @transform_2, window_bounds = array<i64: 1, 4>}, {pipeline_mode = #tpu.pipeline_mode<synchronous>, transform_indices = @transform_3, window_bounds = array<i64: 4, 64>}, {pipeline_mode = #tpu.pipeline_mode<synchronous>, transform_indices = @transform_4, window_bounds = array<i64: 1, 64>}, {transform_indices = @transform_5, window_bounds = array<i64: 1, 64, 256>}]} {
    %c0 = arith.constant 0 : index
    %c0_0 = arith.constant 0 : index
    %c0_1 = arith.constant 0 : index
    %0 = vector.load %arg1[%c0, %c0_0, %c0_1] : memref<1x64x256xf32, #tpu.memory_space<vmem>>, vector<1x64x256xf32>
    %cst = arith.constant dense<0xFF800000> : vector<1x64xf32>
    %1 = vector.multi_reduction <maximumf>, %0, %cst [2] : vector<1x64x256xf32> to vector<1x64xf32>
    %cst_2 = arith.constant dense<0.000000e+00> : vector<1x64xf32>
    %2 = vector.multi_reduction <add>, %0, %cst_2 [2] : vector<1x64x256xf32> to vector<1x64xf32>
    %3 = arith.mulf %0, %0 : vector<1x64x256xf32>
    %cst_3 = arith.constant dense<0.000000e+00> : vector<1x64xf32>
    %4 = vector.multi_reduction <add>, %3, %cst_3 [2] : vector<1x64x256xf32> to vector<1x64xf32>
    %cst_4 = arith.constant 3.906250e-03 : f32
    %5 = vector.broadcast %cst_4 : f32 to vector<1x64xf32>
    %6 = arith.mulf %2, %5 : vector<1x64xf32>
    %7 = math.sqrt %4 : vector<1x64xf32>
    %c0_5 = arith.constant 0 : index
    %c0_6 = arith.constant 0 : index
    %8 = vector.load %arg2[%c0_5, %c0_6] : memref<64x4xf32, #tpu.memory_space<vmem>>, vector<64x4xf32>
    %c0_7 = arith.constant 0 : index
    %c0_8 = arith.constant 0 : index
    %9 = vector.load %arg3[%c0_7, %c0_8] : memref<1x4xf32, #tpu.memory_space<vmem>>, vector<1x4xf32>
    %c0_9 = arith.constant 0 : index
    %c0_10 = arith.constant 0 : index
    %10 = vector.load %arg4[%c0_9, %c0_10] : memref<4x64xf32, #tpu.memory_space<vmem>>, vector<4x64xf32>
    %c0_11 = arith.constant 0 : index
    %c0_12 = arith.constant 0 : index
    %11 = vector.load %arg5[%c0_11, %c0_12] : memref<1x64xf32, #tpu.memory_space<vmem>>, vector<1x64xf32>
    %cst_13 = arith.constant dense<0.000000e+00> : vector<1x4xf32>
    %12 = tpu.matmul %6, %8, %cst_13 {dimension_numbers = #tpu.dot_dimension_numbers<[1], [0], [0], [1], [0, 0, 1, 1], [], []>} : vector<1x64xf32>, vector<64x4xf32>, vector<1x4xf32> -> vector<1x4xf32>
    %13 = arith.addf %12, %9 : vector<1x4xf32>
    %cst_14 = arith.constant 0.000000e+00 : f32
    %14 = vector.broadcast %cst_14 : f32 to vector<1x4xf32>
    %15 = arith.maximumf %13, %14 : vector<1x4xf32>
    %cst_15 = arith.constant dense<0.000000e+00> : vector<1x4xf32>
    %16 = tpu.matmul %1, %8, %cst_15 {dimension_numbers = #tpu.dot_dimension_numbers<[1], [0], [0], [1], [0, 0, 1, 1], [], []>} : vector<1x64xf32>, vector<64x4xf32>, vector<1x4xf32> -> vector<1x4xf32>
    %17 = arith.addf %16, %9 : vector<1x4xf32>
    %cst_16 = arith.constant 0.000000e+00 : f32
    %18 = vector.broadcast %cst_16 : f32 to vector<1x4xf32>
    %19 = arith.maximumf %17, %18 : vector<1x4xf32>
    %20 = arith.addf %15, %19 : vector<1x4xf32>
    %cst_17 = arith.constant dense<0.000000e+00> : vector<1x4xf32>
    %21 = tpu.matmul %7, %8, %cst_17 {dimension_numbers = #tpu.dot_dimension_numbers<[1], [0], [0], [1], [0, 0, 1, 1], [], []>} : vector<1x64xf32>, vector<64x4xf32>, vector<1x4xf32> -> vector<1x4xf32>
    %22 = arith.addf %21, %9 : vector<1x4xf32>
    %cst_18 = arith.constant 0.000000e+00 : f32
    %23 = vector.broadcast %cst_18 : f32 to vector<1x4xf32>
    %24 = arith.maximumf %22, %23 : vector<1x4xf32>
    %25 = arith.addf %20, %24 : vector<1x4xf32>
    %cst_19 = arith.constant dense<0.000000e+00> : vector<1x64xf32>
    %26 = tpu.matmul %25, %10, %cst_19 {dimension_numbers = #tpu.dot_dimension_numbers<[1], [0], [0], [1], [0, 0, 1, 1], [], []>} : vector<1x4xf32>, vector<4x64xf32>, vector<1x64xf32> -> vector<1x64xf32>
    %cst_20 = arith.constant 3.000000e+00 : f32
    %27 = vector.broadcast %cst_20 : f32 to vector<1x64xf32>
    %28 = arith.mulf %27, %11 : vector<1x64xf32>
    %29 = arith.addf %26, %28 : vector<1x64xf32>
    %30 = arith.negf %29 : vector<1x64xf32>
    %31 = math.exp %30 : vector<1x64xf32>
    %cst_21 = arith.constant 1.000000e+00 : f32
    %32 = vector.broadcast %cst_21 : f32 to vector<1x64xf32>
    %33 = arith.addf %32, %31 : vector<1x64xf32>
    %34 = arith.divf %32, %33 : vector<1x64xf32>
    %35 = vector.shape_cast %34 : vector<1x64xf32> to vector<1x64x1xf32>
    %36 = vector.broadcast %35 : vector<1x64x1xf32> to vector<1x64x256xf32>
    %37 = arith.mulf %0, %36 : vector<1x64x256xf32>
    %c0_22 = arith.constant 0 : index
    %c0_23 = arith.constant 0 : index
    %c0_24 = arith.constant 0 : index
    %38 = vector.load %arg6[%c0_22, %c0_23, %c0_24] : memref<1x64x256xf32, #tpu.memory_space<vmem>>, vector<1x64x256xf32>
    tpu.vector_store %arg6[%c0_22, %c0_23, %c0_24], %37 {strides = array<i32>} : memref<1x64x256xf32, #tpu.memory_space<vmem>>, vector<1x64x256xf32>,
    return
  }
  func.func @transform_0(%arg0: i32) -> (i32, i32, i32) {
    %c0_i32 = arith.constant 0 : i32
    %c0_i32_0 = arith.constant 0 : i32
    %c0_i32_1 = arith.constant 0 : i32
    return %arg0, %c0_i32, %c0_i32_0 : i32, i32, i32
  }
  func.func @transform_1(%arg0: i32) -> (i32, i32) {
    %c0_i32 = arith.constant 0 : i32
    %c0_i32_0 = arith.constant 0 : i32
    %c0_i32_1 = arith.constant 0 : i32
    return %c0_i32, %c0_i32_0 : i32, i32
  }
  func.func @transform_2(%arg0: i32) -> (i32, i32) {
    %c0_i32 = arith.constant 0 : i32
    %c0_i32_0 = arith.constant 0 : i32
    %c0_i32_1 = arith.constant 0 : i32
    return %c0_i32, %c0_i32_0 : i32, i32
  }
  func.func @transform_3(%arg0: i32) -> (i32, i32) {
    %c0_i32 = arith.constant 0 : i32
    %c0_i32_0 = arith.constant 0 : i32
    %c0_i32_1 = arith.constant 0 : i32
    return %c0_i32, %c0_i32_0 : i32, i32
  }
  func.func @transform_4(%arg0: i32) -> (i32, i32) {
    %c0_i32 = arith.constant 0 : i32
    %c0_i32_0 = arith.constant 0 : i32
    %c0_i32_1 = arith.constant 0 : i32
    return %c0_i32, %c0_i32_0 : i32, i32
  }
  func.func @transform_5(%arg0: i32) -> (i32, i32, i32) {
    %c0_i32 = arith.constant 0 : i32
    %c0_i32_0 = arith.constant 0 : i32
    %c0_i32_1 = arith.constant 0 : i32
    return %arg0, %c0_i32, %c0_i32_0 : i32, i32, i32
  }
}

</mosaic_0001>

<llo_original>
// kernel: tpu_custom_call.1
$region0: #{tpu_custom_call.1}
  #allocation0 [shape = 'u32[]', space=smem, size = 0x4, offset = 0x4, fixed_abs, tag = 'smem constant byte address 0x4 - core index']
  #allocation1 [shape = 'u32[144,128]{1,0:T(1,128)}', space=vmem, size = 0x12000, scoped, tag = 'internal scratch']
  %s0 = inlined_call_operand.hbm [shape: f32[4,64,256], index: 0, kind: input, shape index: {}]
  %s1 = inlined_call_operand.vmem [shape: f32[64,4], index: 1, kind: input, shape index: {}]
  %s2 = inlined_call_operand.vmem [shape: f32[1,4], index: 2, kind: input, shape index: {}]
  %s3 = inlined_call_operand.vmem [shape: f32[4,64], index: 3, kind: input, shape index: {}]
  %s4 = inlined_call_operand.vmem [shape: f32[1,64], index: 4, kind: input, shape index: {}]
  %s5 = inlined_call_operand.hbm [shape: f32[4,64,256], index: 5, kind: output, shape index: {}]
  %s6 = sld [smem:[#allocation0]]
  $region57: #{tpu_custom_call.1} parent=0
    _
  %s8 = ssub.s32 1, %s6
  %s9 = scalar_select 0, %s8, %s6
  $region1: #{tpu_custom_call.1} parent=0
    #allocation2 [shape = 'u8[131072]{0}', space=vmem, size = 0x20000, scoped, tag = 'input window, operand 0']
    #allocation3 [shape = 's32[2]{0}', space=sflag, size = 0x8, scoped, tag = 'scoped memory for tpu_custom_call.1']
    #allocation4 [shape = 's32[2]{0}', space=sflag, size = 0x8, scoped, tag = 'scoped memory for tpu_custom_call.1']
    #allocation5 [shape = 'u8[131072]{0}', space=vmem, size = 0x20000, scoped, tag = 'output window, operand 0']
    %10 = vsyncpa [#allocation3], 0
    %s11 = scalar_lea.sflag [#allocation3], 1
    %12 = vsyncpa %s11, 0
    %13 = vsyncpa [#allocation4], 0
    %s14 = scalar_lea.sflag [#allocation4], 1
    %15 = vsyncpa %s14, 0
    loop: start=0, step=1, limit=6
    $region2: #{tpu_custom_call.1} parent=1 // loop_pre_header
      _
    $region3: #{tpu_custom_call.1} parent=1 // loop_header
      %s17 = sphi 0, %s21
      %p18 = scmp.ge.s32.totalorder %s17, 6
      %s27 = sphi 0, %s29
      %s30 = sphi 0, %s27
      %s31 = sphi 0, %s30
      %s47 = sphi 0, %s31
      %s51 = sphi 0, %s51
      %s53 = sphi 0, %s51
      %s54 = sphi 0, %s53
      %s68 = sphi 0, %s54
      %s72 = sphi 0, %s72
      %s74 = sphi 0, %s72
      %s75 = sphi 0, %s74
      %s89 = sphi 0, %s75
      %s93 = sphi 0, %s93
      %s95 = sphi 0, %s93
      %s96 = sphi 0, %s95
      %s110 = sphi 0, %s96
      %s114 = sphi 0, %s114
      %s116 = sphi 0, %s114
      %s117 = sphi 0, %s116
      %s131 = sphi 0, %s117
      %s137 = sphi 0, %s139
      %s140 = sphi 0, %s137
      %s141 = sphi 0, %s140
      %s157 = sphi 0, %s141
    $region4: #{tpu_custom_call.1} parent=1 // loop_header_branch
      %20 = sbr.rel (%p18) target = $region8
    $region5: #{tpu_custom_call.1} parent=1 // loop_body
      %s22 = ssub.s32 %s17, 1
      %s23 = ssub.s32 %s17, 2
      %s24 = sadd.s32 %s17, 1
      %s25 = ssub.s32 %s17, %s24
      %p26 = scmp.eq.s32.totalorder %s25, 0
      %s28 = sadd.s32 %s27, 1
      %s29 = scalar_select %p26, %s27, %s28
      %p32 = pneg %p26
      %p33 = scmp.eq.s32.totalorder %s17, 3
      %p34 = por %p32, %p33
      %p35 = scmp.ne.s32.totalorder %s27, %s30
      %p36 = scmp.eq.s32.totalorder %s17, 0
      %p37 = por %p35, %p36
      %p38 = scmp.ne.s32.totalorder %s27, %s30
      %p39 = scmp.eq.s32.totalorder %s22, 3
      %p40 = por %p38, %p39
      %p41 = scmp.ne.s32.totalorder %s30, %s31
      %p42 = scmp.eq.s32.totalorder %s22, 0
      %p43 = por %p41, %p42
      %p44 = scmp.ne.s32.totalorder %s30, %s31
      %p45 = scmp.eq.s32.totalorder %s23, 3
      %p46 = por %p44, %p45
      %p48 = scmp.ne.s32.totalorder %s31, %s47
      %p49 = scmp.eq.s32.totalorder %s23, 0
      %p50 = por %p48, %p49
      %s52 = sadd.s32 %s51, 1
      %p55 = scmp.eq.s32.totalorder %s17, 3
      %p56 = scmp.ne.s32.totalorder %s51, %s53
      %p57 = scmp.eq.s32.totalorder %s17, 0
      %p58 = por %p56, %p57
      %p59 = scmp.ne.s32.totalorder %s51, %s53
      %p60 = scmp.eq.s32.totalorder %s22, 3
      %p61 = por %p59, %p60
      %p62 = scmp.ne.s32.totalorder %s53, %s54
      %p63 = scmp.eq.s32.totalorder %s22, 0
      %p64 = por %p62, %p63
      %p65 = scmp.ne.s32.totalorder %s53, %s54
      %p66 = scmp.eq.s32.totalorder %s23, 3
      %p67 = por %p65, %p66
      %p69 = scmp.ne.s32.totalorder %s54, %s68
      %p70 = scmp.eq.s32.totalorder %s23, 0
      %p71 = por %p69, %p70
      %s73 = sadd.s32 %s72, 1
      %p76 = scmp.eq.s32.totalorder %s17, 3
      %p77 = scmp.ne.s32.totalorder %s72, %s74
      %p78 = scmp.eq.s32.totalorder %s17, 0
      %p79 = por %p77, %p78
      %p80 = scmp.ne.s32.totalorder %s72, %s74
      %p81 = scmp.eq.s32.totalorder %s22, 3
      %p82 = por %p80, %p81
      %p83 = scmp.ne.s32.totalorder %s74, %s75
      %p84 = scmp.eq.s32.totalorder %s22, 0
      %p85 = por %p83, %p84
      %p86 = scmp.ne.s32.totalorder %s74, %s75
      %p87 = scmp.eq.s32.totalorder %s23, 3
      %p88 = por %p86, %p87
      %p90 = scmp.ne.s32.totalorder %s75, %s89
      %p91 = scmp.eq.s32.totalorder %s23, 0
      %p92 = por %p90, %p91
      %s94 = sadd.s32 %s93, 1
      %p97 = scmp.eq.s32.totalorder %s17, 3
      %p98 = scmp.ne.s32.totalorder %s93, %s95
      %p99 = scmp.eq.s32.totalorder %s17, 0
      %p100 = por %p98, %p99
      %p101 = scmp.ne.s32.totalorder %s93, %s95
      %p102 = scmp.eq.s32.totalorder %s22, 3
      %p103 = por %p101, %p102
      %p104 = scmp.ne.s32.totalorder %s95, %s96
      %p105 = scmp.eq.s32.totalorder %s22, 0
      %p106 = por %p104, %p105
      %p107 = scmp.ne.s32.totalorder %s95, %s96
      %p108 = scmp.eq.s32.totalorder %s23, 3
      %p109 = por %p107, %p108
      %p111 = scmp.ne.s32.totalorder %s96, %s110
      %p112 = scmp.eq.s32.totalorder %s23, 0
      %p113 = por %p111, %p112
      %s115 = sadd.s32 %s114, 1
      %p118 = scmp.eq.s32.totalorder %s17, 3
      %p119 = scmp.ne.s32.totalorder %s114, %s116
      %p120 = scmp.eq.s32.totalorder %s17, 0
      %p121 = por %p119, %p120
      %p122 = scmp.ne.s32.totalorder %s114, %s116
      %p123 = scmp.eq.s32.totalorder %s22, 3
      %p124 = por %p122, %p123
      %p125 = scmp.ne.s32.totalorder %s116, %s117
      %p126 = scmp.eq.s32.totalorder %s22, 0
      %p127 = por %p125, %p126
      %p128 = scmp.ne.s32.totalorder %s116, %s117
      %p129 = scmp.eq.s32.totalorder %s23, 3
      %p130 = por %p128, %p129
      %p132 = scmp.ne.s32.totalorder %s117, %s131
      %p133 = scmp.eq.s32.totalorder %s23, 0
      %p134 = por %p132, %p133
      %s135 = ssub.s32 %s17, %s24
      %p136 = scmp.eq.s32.totalorder %s135, 0
      %s138 = sadd.s32 %s137, 1
      %s139 = scalar_select %p136, %s137, %s138
      %p142 = pneg %p136
      %p143 = scmp.eq.s32.totalorder %s17, 3
      %p144 = por %p142, %p143
      %p145 = scmp.ne.s32.totalorder %s137, %s140
      %p146 = scmp.eq.s32.totalorder %s17, 0
      %p147 = por %p145, %p146
      %p148 = scmp.ne.s32.totalorder %s137, %s140
      %p149 = scmp.eq.s32.totalorder %s22, 3
      %p150 = por %p148, %p149
      %p151 = scmp.ne.s32.totalorder %s140, %s141
      %p152 = scmp.eq.s32.totalorder %s22, 0
      %p153 = por %p151, %p152
      %p154 = scmp.ne.s32.totalorder %s140, %s141
      %p155 = scmp.eq.s32.totalorder %s23, 3
      %p156 = por %p154, %p155
      %p158 = scmp.ne.s32.totalorder %s141, %s157
      %p159 = scmp.eq.s32.totalorder %s23, 0
      %p160 = por %p158, %p159
      %p161 = scmp.le.s32.totalorder 1, %s17
      %p162 = scmp.lt.s32.totalorder %s17, 5
      %p163 = pnand %p161, %p162
      %p164 = pneg %p163
      // Predicated region
      $region9: #{tpu_custom_call.1} parent=5 // pred_check
        _
      $region10: #{tpu_custom_call.1} parent=5 // pred_check_branch
        %166 = sbr.rel (%p163) target = $region12
      $region11: #{tpu_custom_call.1} parent=5 // pred_region
        %s167 = ssub.s32 %s17, 1
        // Predicated region
        $region13: #{tpu_custom_call.1} parent=11 // pred_check
          %p168 = pneg %p64
        $region14: #{tpu_custom_call.1} parent=11 // pred_check_branch
          %170 = sbr.rel (%p168) target = $region16
        $region15: #{tpu_custom_call.1} parent=11 // pred_region
          _
        $region16: #{tpu_custom_call.1} parent=11 // pred_fallthru
          _
        // Predicated region
        $region17: #{tpu_custom_call.1} parent=11 // pred_check
          %p171 = pneg %p85
        $region18: #{tpu_custom_call.1} parent=11 // pred_check_branch
          %173 = sbr.rel (%p171) target = $region20
        $region19: #{tpu_custom_call.1} parent=11 // pred_region
          _
        $region20: #{tpu_custom_call.1} parent=11 // pred_fallthru
          _
        // Predicated region
        $region21: #{tpu_custom_call.1} parent=11 // pred_check
          %p174 = pneg %p106
        $region22: #{tpu_custom_call.1} parent=11 // pred_check_branch
          %176 = sbr.rel (%p174) target = $region24
        $region23: #{tpu_custom_call.1} parent=11 // pred_region
          _
        $region24: #{tpu_custom_call.1} parent=11 // pred_fallthru
          _
        // Predicated region
        $region25: #{tpu_custom_call.1} parent=11 // pred_check
          %p177 = pneg %p127
        $region26: #{tpu_custom_call.1} parent=11 // pred_check_branch
          %179 = sbr.rel (%p177) target = $region28
        $region27: #{tpu_custom_call.1} parent=11 // pred_region
          _
        $region28: #{tpu_custom_call.1} parent=11 // pred_fallthru
          _
      $region12: #{tpu_custom_call.1} parent=5 // pred_fallthru
        _
      %p180 = scmp.lt.s32.totalorder %s17, 4
      // Predicated region
      $region29: #{tpu_custom_call.1} parent=5 // pred_check
        %p181 = pneg %p180
      $region30: #{tpu_custom_call.1} parent=5 // pred_check_branch
        %183 = sbr.rel (%p181) target = $region32
      $region31: #{tpu_custom_call.1} parent=5 // pred_region
        // Predicated region
        $region33: #{tpu_custom_call.1} parent=31 // pred_check
          %p184 = pneg %p37
        $region34: #{tpu_custom_call.1} parent=31 // pred_check_branch
          %186 = sbr.rel (%p184) target = $region36
        $region35: #{tpu_custom_call.1} parent=31 // pred_region
          %s187 = sand.u32 %s27, 1
          %s188 = scalar_lea.sflag [#allocation3], %s187
          %s189 = sand.u32 %s27, 1
          %s190 = smul.addr %s189, 128
          %s191 = scalar_lea.vmem [#allocation2], %s190
          %s193 = ssub.s32 2048, 2048
          %194 = vsyncadd %s188, %s193
          %s195 = smul.addr %s17, 16
          %s196 = smul.addr %s195, 128
          %s197 = scalar_lea.hbm %s0, %s196
          %s198 = sshll.u32 %s191, 4
          %s199 = int_to_ptr.vmem [resolvable:$true] %s198
          %204 = dma.hbm_to_vmem [thread:$0]  %s197, 2048, %s199, %s188, 256, 256, 16
        $region36: #{tpu_custom_call.1} parent=31 // pred_fallthru
          _
      $region32: #{tpu_custom_call.1} parent=5 // pred_fallthru
        _
      %p205 = scmp.le.s32.totalorder 1, %s17
      %p206 = scmp.lt.s32.totalorder %s17, 5
      %p207 = pnand %p205, %p206
      %p208 = pneg %p207
      // Predicated region
      $region37: #{tpu_custom_call.1} parent=5 // pred_check
        _
      $region38: #{tpu_custom_call.1} parent=5 // pred_check_branch
        %210 = sbr.rel (%p207) target = $region40
      $region39: #{tpu_custom_call.1} parent=5 // pred_region
        %s211 = ssub.s32 %s17, 1
        %s212 = sand.u32 %s30, 1
        %s213 = scalar_lea.sflag [#allocation3], %s212
        %s214 = sand.u32 %s30, 1
        %s215 = smul.addr %s214, 128
        %s216 = scalar_lea.vmem [#allocation2], %s215
        // Predicated region
        $region41: #{tpu_custom_call.1} parent=39 // pred_check
          %p217 = pneg %p43
        $region42: #{tpu_custom_call.1} parent=39 // pred_check_branch
          %219 = sbr.rel (%p217) target = $region44
        $region43: #{tpu_custom_call.1} parent=39 // pred_region
          %220 = dma.done %s213, 2048
        $region44: #{tpu_custom_call.1} parent=39 // pred_fallthru
          _
        %s221 = sand.u32 %s30, 1
        %s222 = scalar_lea.sflag [#allocation3], %s221
        %s223 = sand.u32 %s30, 1
        %s224 = smul.addr %s223, 128
        %s225 = scalar_lea.vmem [#allocation2], %s224
        %p226 = pneg %p43
        %p227 = pneg %p40
        %p228 = pneg %p64
        %p229 = pneg %p61
        %p230 = pneg %p85
        %p231 = pneg %p82
        %p232 = pneg %p106
        %p233 = pneg %p103
        %p234 = pneg %p127
        %p235 = pneg %p124
        %p236 = pneg %p153
        %p237 = pneg %p150
        %s238 = sand.u32 %s140, 1
        %s239 = scalar_lea.sflag [#allocation4], %s238
        %s240 = sand.u32 %s140, 1
        %s241 = smul.addr %s240, 128
        %s242 = scalar_lea.vmem [#allocation5], %s241
        %v243 = vld [vmem:[%s216] sm:$0xff]
        %v244 = vld [vmem:[%s216 + $0x8] sm:$0xff]
        %v245 = vld [vmem:[%s216 + $0x10] sm:$0xff]
        %v246 = vld [vmem:[%s216 + $0x18] sm:$0xff]
        %v247 = vld [vmem:[%s216 + $0x20] sm:$0xff]
        %v248 = vld [vmem:[%s216 + $0x28] sm:$0xff]
        %v249 = vld [vmem:[%s216 + $0x30] sm:$0xff]
        %v250 = vld [vmem:[%s216 + $0x38] sm:$0xff]
        %v251 = vld [vmem:[%s216 + $0x40] sm:$0xff]
        %v252 = vld [vmem:[%s216 + $0x48] sm:$0xff]
        %v253 = vld [vmem:[%s216 + $0x50] sm:$0xff]
        %v254 = vld [vmem:[%s216 + $0x58] sm:$0xff]
        %v255 = vld [vmem:[%s216 + $0x60] sm:$0xff]
        %v256 = vld [vmem:[%s216 + $0x68] sm:$0xff]
        %v257 = vld [vmem:[%s216 + $0x70] sm:$0xff]
        %v258 = vld [vmem:[%s216 + $0x78] sm:$0xff]
        %v259 = vmax.f32 %v243, %v244
        %260 = vmax.xlane.f32.xlu0 %v259
        %v261 = vpop.xlane.xlu0 %260
        %v262 = vmax.f32 %v245, %v246
        %263 = vmax.xlane.f32.xlu0 %v262
        %v264 = vpop.xlane.xlu0 %263
        %v265 = vmax.f32 %v247, %v248
        %266 = vmax.xlane.f32.xlu0 %v265
        %v267 = vpop.xlane.xlu0 %266
        %v268 = vmax.f32 %v249, %v250
        %269 = vmax.xlane.f32.xlu0 %v268
        %v270 = vpop.xlane.xlu0 %269
        %v271 = vmax.f32 %v251, %v252
        %272 = vmax.xlane.f32.xlu0 %v271
        %v273 = vpop.xlane.xlu0 %272
        %v274 = vmax.f32 %v253, %v254
        %275 = vmax.xlane.f32.xlu0 %v274
        %v276 = vpop.xlane.xlu0 %275
        %v277 = vmax.f32 %v255, %v256
        %278 = vmax.xlane.f32.xlu0 %v277
        %v279 = vpop.xlane.xlu0 %278
        %v280 = vmax.f32 %v257, %v258
        %281 = vmax.xlane.f32.xlu0 %v280
        %v282 = vpop.xlane.xlu0 %281
        %v283 = vadd.f32 %v243, %v244
        %284 = vadd.xlane.f32.xlu0 %v283
        %v285 = vpop.xlane.xlu0 %284
        %v286 = vadd.f32 %v245, %v246
        %287 = vadd.xlane.f32.xlu0 %v286
        %v288 = vpop.xlane.xlu0 %287
        %v289 = vadd.f32 %v247, %v248
        %290 = vadd.xlane.f32.xlu0 %v289
        %v291 = vpop.xlane.xlu0 %290
        %v292 = vadd.f32 %v249, %v250
        %293 = vadd.xlane.f32.xlu0 %v292
        %v294 = vpop.xlane.xlu0 %293
        %v295 = vadd.f32 %v251, %v252
        %296 = vadd.xlane.f32.xlu0 %v295
        %v297 = vpop.xlane.xlu0 %296
        %v298 = vadd.f32 %v253, %v254
        %299 = vadd.xlane.f32.xlu0 %v298
        %v300 = vpop.xlane.xlu0 %299
        %v301 = vadd.f32 %v255, %v256
        %302 = vadd.xlane.f32.xlu0 %v301
        %v303 = vpop.xlane.xlu0 %302
        %v304 = vadd.f32 %v257, %v258
        %305 = vadd.xlane.f32.xlu0 %v304
        %v306 = vpop.xlane.xlu0 %305
        %v307 = vmul.f32 %v243, %v243
        %v308 = vmul.f32 %v244, %v244
        %v309 = vmul.f32 %v245, %v245
        %v310 = vmul.f32 %v246, %v246
        %v311 = vmul.f32 %v247, %v247
        %v312 = vmul.f32 %v248, %v248
        %v313 = vmul.f32 %v249, %v249
        %v314 = vmul.f32 %v250, %v250
        %v315 = vmul.f32 %v251, %v251
        %v316 = vmul.f32 %v252, %v252
        %v317 = vmul.f32 %v253, %v253
        %v318 = vmul.f32 %v254, %v254
        %v319 = vmul.f32 %v255, %v255
        %v320 = vmul.f32 %v256, %v256
        %v321 = vmul.f32 %v257, %v257
        %v322 = vmul.f32 %v258, %v258
        %v323 = vadd.f32 %v307, %v308
        %324 = vadd.xlane.f32.xlu0 %v323
        %v325 = vpop.xlane.xlu0 %324
        %v326 = vadd.f32 %v309, %v310
        %327 = vadd.xlane.f32.xlu0 %v326
        %v328 = vpop.xlane.xlu0 %327
        %v329 = vadd.f32 %v311, %v312
        %330 = vadd.xlane.f32.xlu0 %v329
        %v331 = vpop.xlane.xlu0 %330
        %v332 = vadd.f32 %v313, %v314
        %333 = vadd.xlane.f32.xlu0 %v332
        %v334 = vpop.xlane.xlu0 %333
        %v335 = vadd.f32 %v315, %v316
        %336 = vadd.xlane.f32.xlu0 %v335
        %v337 = vpop.xlane.xlu0 %336
        %v338 = vadd.f32 %v317, %v318
        %339 = vadd.xlane.f32.xlu0 %v338
        %v340 = vpop.xlane.xlu0 %339
        %v341 = vadd.f32 %v319, %v320
        %342 = vadd.xlane.f32.xlu0 %v341
        %v343 = vpop.xlane.xlu0 %342
        %v344 = vadd.f32 %v321, %v322
        %345 = vadd.xlane.f32.xlu0 %v344
        %v346 = vpop.xlane.xlu0 %345
        %v347 = vmul.f32 %v285, 0.00390625
        %v348 = vmul.f32 %v288, 0.00390625
        %v349 = vmul.f32 %v291, 0.00390625
        %v350 = vmul.f32 %v294, 0.00390625
        %v351 = vmul.f32 %v297, 0.00390625
        %v352 = vmul.f32 %v300, 0.00390625
        %v353 = vmul.f32 %v303, 0.00390625
        %v354 = vmul.f32 %v306, 0.00390625
        %v355 = vrsqrt.pop %v325
        %v356 = vmul.f32 %v325, %v355
        %vm357 = vcmp.eq.f32.partialorder %v325, inf
        %v358 = vsel %vm357, %v325, %v356
        %vm359 = vcmp.eq.f32.partialorder %v325, 0.0
        %v360 = vand.u32 %v325, 2147483648
        %v361 = vsel %vm359, %v360, %v358
        %v362 = vrsqrt.pop %v328
        %v363 = vmul.f32 %v328, %v362
        %vm364 = vcmp.eq.f32.partialorder %v328, inf
        %v365 = vsel %vm364, %v328, %v363
        %vm366 = vcmp.eq.f32.partialorder %v328, 0.0
        %v367 = vand.u32 %v328, 2147483648
        %v368 = vsel %vm366, %v367, %v365
        %v369 = vrsqrt.pop %v331
        %v370 = vmul.f32 %v331, %v369
        %vm371 = vcmp.eq.f32.partialorder %v331, inf
        %v372 = vsel %vm371, %v331, %v370
        %vm373 = vcmp.eq.f32.partialorder %v331, 0.0
        %v374 = vand.u32 %v331, 2147483648
        %v375 = vsel %vm373, %v374, %v372
        %v376 = vrsqrt.pop %v334
        %v377 = vmul.f32 %v334, %v376
        %vm378 = vcmp.eq.f32.partialorder %v334, inf
        %v379 = vsel %vm378, %v334, %v377
        %vm380 = vcmp.eq.f32.partialorder %v334, 0.0
        %v381 = vand.u32 %v334, 2147483648
        %v382 = vsel %vm380, %v381, %v379
        %v383 = vrsqrt.pop %v337
        %v384 = vmul.f32 %v337, %v383
        %vm385 = vcmp.eq.f32.partialorder %v337, inf
        %v386 = vsel %vm385, %v337, %v384
        %vm387 = vcmp.eq.f32.partialorder %v337, 0.0
        %v388 = vand.u32 %v337, 2147483648
        %v389 = vsel %vm387, %v388, %v386
        %v390 = vrsqrt.pop %v340
        %v391 = vmul.f32 %v340, %v390
        %vm392 = vcmp.eq.f32.partialorder %v340, inf
        %v393 = vsel %vm392, %v340, %v391
        %vm394 = vcmp.eq.f32.partialorder %v340, 0.0
        %v395 = vand.u32 %v340, 2147483648
        %v396 = vsel %vm394, %v395, %v393
        %v397 = vrsqrt.pop %v343
        %v398 = vmul.f32 %v343, %v397
        %vm399 = vcmp.eq.f32.partialorder %v343, inf
        %v400 = vsel %vm399, %v343, %v398
        %vm401 = vcmp.eq.f32.partialorder %v343, 0.0
        %v402 = vand.u32 %v343, 2147483648
        %v403 = vsel %vm401, %v402, %v400
        %v404 = vrsqrt.pop %v346
        %v405 = vmul.f32 %v346, %v404
        %vm406 = vcmp.eq.f32.partialorder %v346, inf
        %v407 = vsel %vm406, %v346, %v405
        %vm408 = vcmp.eq.f32.partialorder %v346, 0.0
        %v409 = vand.u32 %v346, 2147483648
        %v410 = vsel %vm408, %v409, %v407
        %v411 = vld [vmem:[%s1] sm:$0xff]
        %v412 = vld [vmem:[%s1 + $0x8] sm:$0xff]
        %v413 = vld [vmem:[%s1 + $0x10] sm:$0xff]
        %v414 = vld [vmem:[%s1 + $0x18] sm:$0xff]
        %v415 = vld [vmem:[%s1 + $0x20] sm:$0xff]
        %v416 = vld [vmem:[%s1 + $0x28] sm:$0xff]
        %v417 = vld [vmem:[%s1 + $0x30] sm:$0xff]
        %v418 = vld [vmem:[%s1 + $0x38] sm:$0xff]
        %v419 = vld [vmem:[%s2] sm:$0x1]
        %v420 = vld [vmem:[%s3] sm:$0xf]
        %v421 = vld [vmem:[%s4] sm:$0x1]
        %v430 = vlaneseq
        %v431 = vand.u32 %v430, 127
        %v432 = vlaneseq
        %v433 = vshrl.u32 %v432, 7
        %v434 = vsub.s32 %v431, %v433
        %v435 = vrot.slane %v347, %v434
        %v436 = vadd.s32 %v431, 4294967288
        %v437 = vlaneseq
        %v438 = vshrl.u32 %v437, 7
        %v439 = vsub.s32 %v436, %v438
        %v440 = vrot.slane %v348, %v439
        %vm441 = vcmask 130112
        %v442 = vsel %vm441, %v440, %v435
        %v443 = vadd.s32 %v431, 4294967280
        %v444 = vlaneseq
        %v445 = vshrl.u32 %v444, 7
        %v446 = vsub.s32 %v443, %v445
        %v447 = vrot.slane %v349, %v446
        %vm448 = vcmask 195712
        %v449 = vsel %vm448, %v447, %v442
        %v450 = vadd.s32 %v431, 4294967272
        %v451 = vlaneseq
        %v452 = vshrl.u32 %v451, 7
        %v453 = vsub.s32 %v450, %v452
        %v454 = vrot.slane %v350, %v453
        %vm455 = vcmask 261312
        %v456 = vsel %vm455, %v454, %v449
        %v457 = vadd.s32 %v431, 4294967264
        %v458 = vlaneseq
        %v459 = vshrl.u32 %v458, 7
        %v460 = vsub.s32 %v457, %v459
        %v461 = vrot.slane %v351, %v460
        %vm462 = vcmask 326912
        %v463 = vsel %vm462, %v461, %v456
        %v464 = vadd.s32 %v431, 4294967256
        %v465 = vlaneseq
        %v466 = vshrl.u32 %v465, 7
        %v467 = vsub.s32 %v464, %v466
        %v468 = vrot.slane %v352, %v467
        %vm469 = vcmask 392512
        %v470 = vsel %vm469, %v468, %v463
        %v471 = vadd.s32 %v431, 4294967248
        %v472 = vlaneseq
        %v473 = vshrl.u32 %v472, 7
        %v474 = vsub.s32 %v471, %v473
        %v475 = vrot.slane %v353, %v474
        %vm476 = vcmask 458112
        %v477 = vsel %vm476, %v475, %v470
        %v478 = vadd.s32 %v431, 4294967240
        %v479 = vlaneseq
        %v480 = vshrl.u32 %v479, 7
        %v481 = vsub.s32 %v478, %v480
        %v482 = vrot.slane %v354, %v481
        %vm483 = vcmask 523712
        %v484 = vsel %vm483, %v482, %v477
        %vm485 = vcmask 523264
        %v486 = vsel %vm485, %v484, 0
        %488 = vmatprep.subr.mxu0 0.0
        %489 = vmatpush1.msra.mxu0 0.0
        %490 = vmatprep.subr.mxu0 0.0
        %491 = vmatpush1.msra.mxu0 0.0
        %492 = vmatprep.subr.mxu0 0.0
        %493 = vmatpush1.msra.mxu0 0.0
        %494 = vmatprep.subr.mxu0 0.0
        %495 = vmatpush1.msra.mxu0 0.0
        %496 = vmatprep.subr.mxu0 0.0
        %497 = vmatpush1.msra.mxu0 0.0
        %498 = vmatprep.subr.mxu0 0.0
        %499 = vmatpush1.msra.mxu0 0.0
        %500 = vmatprep.subr.mxu0 0.0
        %501 = vmatpush1.msra.mxu0 0.0
        %502 = vmatprep.subr.mxu0 0.0
        %503 = vmatpush1.msra.mxu0 0.0
        %504 = vmatprep.subr.mxu0 0.0
        %505 = vmatpush1.msra.mxu0 %v418
        %506 = vmatprep.subr.mxu0 0.0
        %507 = vmatpush1.msra.mxu0 %v417
        %508 = vmatprep.subr.mxu0 0.0
        %509 = vmatpush1.msra.mxu0 %v416
        %510 = vmatprep.subr.mxu0 0.0
        %511 = vmatpush1.msra.mxu0 %v415
        %512 = vmatprep.subr.mxu0 0.0
        %513 = vmatpush1.msra.mxu0 %v414
        %514 = vmatprep.subr.mxu0 0.0
        %515 = vmatpush1.msra.mxu0 %v413
        %516 = vmatprep.subr.mxu0 0.0
        %517 = vmatpush1.msra.mxu0 %v412
        %518 = vmatprep.subr.mxu0 0.0
        %519 = vmatpush1.msra.mxu0 %v411
        %520 = vmatprep.subr.mxu0 0.0
        %521 = vmatpush2.msra.mxu0 0.0
        %522 = vmatprep.subr.mxu0 0.0
        %523 = vmatpush2.msra.mxu0 0.0
        %524 = vmatprep.subr.mxu0 0.0
        %525 = vmatpush2.msra.mxu0 0.0
        %526 = vmatprep.subr.mxu0 0.0
        %527 = vmatpush2.msra.mxu0 0.0
        %528 = vmatprep.subr.mxu0 0.0
        %529 = vmatpush2.msra.mxu0 0.0
        %530 = vmatprep.subr.mxu0 0.0
        %531 = vmatpush2.msra.mxu0 0.0
        %532 = vmatprep.subr.mxu0 0.0
        %533 = vmatpush2.msra.mxu0 0.0
        %534 = vmatprep.subr.mxu0 0.0
        %535 = vmatpush2.msra.mxu0 0.0
        %536 = vmatprep.subr.mxu0 0.0
        %537 = vmatpush2.msra.mxu0 0.0
        %538 = vmatprep.subr.mxu0 0.0
        %539 = vmatpush2.msra.mxu0 0.0
        %540 = vmatprep.subr.mxu0 0.0
        %541 = vmatpush2.msra.mxu0 0.0
        %542 = vmatprep.subr.mxu0 0.0
        %543 = vmatpush2.msra.mxu0 0.0
        %544 = vmatprep.subr.mxu0 0.0
        %545 = vmatpush2.msra.mxu0 0.0
        %546 = vmatprep.subr.mxu0 0.0
        %547 = vmatpush2.msra.mxu0 0.0
        %548 = vmatprep.subr.mxu0 0.0
        %549 = vmatpush2.msra.mxu0 0.0
        %550 = vmatprep.subr.mxu0 0.0
        %551 = vmatpush2.msra.mxu0 0.0
        %552 = vmatprep.mubr.f32.mxu0 0.0
        %553 = vmatmul.mubr.f32.gmra.mxu0 %v486
        %v554 = vpop.f32.mrf.mxu0
        %v555 = vadd.f32 %v419, %v554
        %v556 = vpop.f32.mrf.mxu0
        %557 = vdwg.mxu0
        %v558 = vmax.f32 %v555, 0.0
        %v567 = vlaneseq
        %v568 = vshrl.u32 %v567, 7
        %v569 = vsub.s32 %v431, %v568
        %v570 = vrot.slane %v261, %v569
        %v571 = vlaneseq
        %v572 = vshrl.u32 %v571, 7
        %v573 = vsub.s32 %v436, %v572
        %v574 = vrot.slane %v264, %v573
        %v575 = vsel %vm441, %v574, %v570
        %v576 = vlaneseq
        %v577 = vshrl.u32 %v576, 7
        %v578 = vsub.s32 %v443, %v577
        %v579 = vrot.slane %v267, %v578
        %v580 = vsel %vm448, %v579, %v575
        %v581 = vlaneseq
        %v582 = vshrl.u32 %v581, 7
        %v583 = vsub.s32 %v450, %v582
        %v584 = vrot.slane %v270, %v583
        %v585 = vsel %vm455, %v584, %v580
        %v586 = vlaneseq
        %v587 = vshrl.u32 %v586, 7
        %v588 = vsub.s32 %v457, %v587
        %v589 = vrot.slane %v273, %v588
        %v590 = vsel %vm462, %v589, %v585
        %v591 = vlaneseq
        %v592 = vshrl.u32 %v591, 7
        %v593 = vsub.s32 %v464, %v592
        %v594 = vrot.slane %v276, %v593
        %v595 = vsel %vm469, %v594, %v590
        %v596 = vlaneseq
        %v597 = vshrl.u32 %v596, 7
        %v598 = vsub.s32 %v471, %v597
        %v599 = vrot.slane %v279, %v598
        %v600 = vsel %vm476, %v599, %v595
        %v601 = vlaneseq
        %v602 = vshrl.u32 %v601, 7
        %v603 = vsub.s32 %v478, %v602
        %v604 = vrot.slane %v282, %v603
        %v605 = vsel %vm483, %v604, %v600
        %v606 = vsel %vm485, %v605, 0
        %608 = vmatprep.subr.mxu0 0.0
        %609 = vmatpush1.msra.mxu0 0.0
        %610 = vmatprep.subr.mxu0 0.0
        %611 = vmatpush1.msra.mxu0 0.0
        %612 = vmatprep.subr.mxu0 0.0
        %613 = vmatpush1.msra.mxu0 0.0
        %614 = vmatprep.subr.mxu0 0.0
        %615 = vmatpush1.msra.mxu0 0.0
        %616 = vmatprep.subr.mxu0 0.0
        %617 = vmatpush1.msra.mxu0 0.0
        %618 = vmatprep.subr.mxu0 0.0
        %619 = vmatpush1.msra.mxu0 0.0
        %620 = vmatprep.subr.mxu0 0.0
        %621 = vmatpush1.msra.mxu0 0.0
        %622 = vmatprep.subr.mxu0 0.0
        %623 = vmatpush1.msra.mxu0 0.0
        %624 = vmatprep.subr.mxu0 0.0
        %625 = vmatpush1.msra.mxu0 %v418
        %626 = vmatprep.subr.mxu0 0.0
        %627 = vmatpush1.msra.mxu0 %v417
        %628 = vmatprep.subr.mxu0 0.0
        %629 = vmatpush1.msra.mxu0 %v416
        %630 = vmatprep.subr.mxu0 0.0
        %631 = vmatpush1.msra.mxu0 %v415
        %632 = vmatprep.subr.mxu0 0.0
        %633 = vmatpush1.msra.mxu0 %v414
        %634 = vmatprep.subr.mxu0 0.0
        %635 = vmatpush1.msra.mxu0 %v413
        %636 = vmatprep.subr.mxu0 0.0
        %637 = vmatpush1.msra.mxu0 %v412
        %638 = vmatprep.subr.mxu0 0.0
        %639 = vmatpush1.msra.mxu0 %v411
        %640 = vmatprep.subr.mxu0 0.0
        %641 = vmatpush2.msra.mxu0 0.0
        %642 = vmatprep.subr.mxu0 0.0
        %643 = vmatpush2.msra.mxu0 0.0
        %644 = vmatprep.subr.mxu0 0.0
        %645 = vmatpush2.msra.mxu0 0.0
        %646 = vmatprep.subr.mxu0 0.0
        %647 = vmatpush2.msra.mxu0 0.0
        %648 = vmatprep.subr.mxu0 0.0
        %649 = vmatpush2.msra.mxu0 0.0
        %650 = vmatprep.subr.mxu0 0.0
        %651 = vmatpush2.msra.mxu0 0.0
        %652 = vmatprep.subr.mxu0 0.0
        %653 = vmatpush2.msra.mxu0 0.0
        %654 = vmatprep.subr.mxu0 0.0
        %655 = vmatpush2.msra.mxu0 0.0
        %656 = vmatprep.subr.mxu0 0.0
        %657 = vmatpush2.msra.mxu0 0.0
        %658 = vmatprep.subr.mxu0 0.0
        %659 = vmatpush2.msra.mxu0 0.0
        %660 = vmatprep.subr.mxu0 0.0
        %661 = vmatpush2.msra.mxu0 0.0
        %662 = vmatprep.subr.mxu0 0.0
        %663 = vmatpush2.msra.mxu0 0.0
        %664 = vmatprep.subr.mxu0 0.0
        %665 = vmatpush2.msra.mxu0 0.0
        %666 = vmatprep.subr.mxu0 0.0
        %667 = vmatpush2.msra.mxu0 0.0
        %668 = vmatprep.subr.mxu0 0.0
        %669 = vmatpush2.msra.mxu0 0.0
        %670 = vmatprep.subr.mxu0 0.0
        %671 = vmatpush2.msra.mxu0 0.0
        %672 = vmatprep.mubr.f32.mxu0 0.0
        %673 = vmatmul.mubr.f32.gmra.mxu0 %v606
        %v674 = vpop.f32.mrf.mxu0
        %v675 = vadd.f32 %v419, %v674
        %v676 = vpop.f32.mrf.mxu0
        %677 = vdwg.mxu0
        %v678 = vmax.f32 %v675, 0.0
        %v679 = vadd.f32 %v558, %v678
        %v688 = vlaneseq
        %v689 = vshrl.u32 %v688, 7
        %v690 = vsub.s32 %v431, %v689
        %v691 = vrot.slane %v361, %v690
        %v692 = vlaneseq
        %v693 = vshrl.u32 %v692, 7
        %v694 = vsub.s32 %v436, %v693
        %v695 = vrot.slane %v368, %v694
        %v696 = vsel %vm441, %v695, %v691
        %v697 = vlaneseq
        %v698 = vshrl.u32 %v697, 7
        %v699 = vsub.s32 %v443, %v698
        %v700 = vrot.slane %v375, %v699
        %v701 = vsel %vm448, %v700, %v696
        %v702 = vlaneseq
        %v703 = vshrl.u32 %v702, 7
        %v704 = vsub.s32 %v450, %v703
        %v705 = vrot.slane %v382, %v704
        %v706 = vsel %vm455, %v705, %v701
        %v707 = vlaneseq
        %v708 = vshrl.u32 %v707, 7
        %v709 = vsub.s32 %v457, %v708
        %v710 = vrot.slane %v389, %v709
        %v711 = vsel %vm462, %v710, %v706
        %v712 = vlaneseq
        %v713 = vshrl.u32 %v712, 7
        %v714 = vsub.s32 %v464, %v713
        %v715 = vrot.slane %v396, %v714
        %v716 = vsel %vm469, %v715, %v711
        %v717 = vlaneseq
        %v718 = vshrl.u32 %v717, 7
        %v719 = vsub.s32 %v471, %v718
        %v720 = vrot.slane %v403, %v719
        %v721 = vsel %vm476, %v720, %v716
        %v722 = vlaneseq
        %v723 = vshrl.u32 %v722, 7
        %v724 = vsub.s32 %v478, %v723
        %v725 = vrot.slane %v410, %v724
        %v726 = vsel %vm483, %v725, %v721
        %v727 = vsel %vm485, %v726, 0
        %729 = vmatprep.subr.mxu0 0.0
        %730 = vmatpush1.msra.mxu0 0.0
        %731 = vmatprep.subr.mxu0 0.0
        %732 = vmatpush1.msra.mxu0 0.0
        %733 = vmatprep.subr.mxu0 0.0
        %734 = vmatpush1.msra.mxu0 0.0
        %735 = vmatprep.subr.mxu0 0.0
        %736 = vmatpush1.msra.mxu0 0.0
        %737 = vmatprep.subr.mxu0 0.0
        %738 = vmatpush1.msra.mxu0 0.0
        %739 = vmatprep.subr.mxu0 0.0
        %740 = vmatpush1.msra.mxu0 0.0
        %741 = vmatprep.subr.mxu0 0.0
        %742 = vmatpush1.msra.mxu0 0.0
        %743 = vmatprep.subr.mxu0 0.0
        %744 = vmatpush1.msra.mxu0 0.0
        %745 = vmatprep.subr.mxu0 0.0
        %746 = vmatpush1.msra.mxu0 %v418
        %747 = vmatprep.subr.mxu0 0.0
        %748 = vmatpush1.msra.mxu0 %v417
        %749 = vmatprep.subr.mxu0 0.0
        %750 = vmatpush1.msra.mxu0 %v416
        %751 = vmatprep.subr.mxu0 0.0
        %752 = vmatpush1.msra.mxu0 %v415
        %753 = vmatprep.subr.mxu0 0.0
        %754 = vmatpush1.msra.mxu0 %v414
        %755 = vmatprep.subr.mxu0 0.0
        %756 = vmatpush1.msra.mxu0 %v413
        %757 = vmatprep.subr.mxu0 0.0
        %758 = vmatpush1.msra.mxu0 %v412
        %759 = vmatprep.subr.mxu0 0.0
        %760 = vmatpush1.msra.mxu0 %v411
        %761 = vmatprep.subr.mxu0 0.0
        %762 = vmatpush2.msra.mxu0 0.0
        %763 = vmatprep.subr.mxu0 0.0
        %764 = vmatpush2.msra.mxu0 0.0
        %765 = vmatprep.subr.mxu0 0.0
        %766 = vmatpush2.msra.mxu0 0.0
        %767 = vmatprep.subr.mxu0 0.0
        %768 = vmatpush2.msra.mxu0 0.0
        %769 = vmatprep.subr.mxu0 0.0
        %770 = vmatpush2.msra.mxu0 0.0
        %771 = vmatprep.subr.mxu0 0.0
        %772 = vmatpush2.msra.mxu0 0.0
        %773 = vmatprep.subr.mxu0 0.0
        %774 = vmatpush2.msra.mxu0 0.0
        %775 = vmatprep.subr.mxu0 0.0
        %776 = vmatpush2.msra.mxu0 0.0
        %777 = vmatprep.subr.mxu0 0.0
        %778 = vmatpush2.msra.mxu0 0.0
        %779 = vmatprep.subr.mxu0 0.0
        %780 = vmatpush2.msra.mxu0 0.0
        %781 = vmatprep.subr.mxu0 0.0
        %782 = vmatpush2.msra.mxu0 0.0
        %783 = vmatprep.subr.mxu0 0.0
        %784 = vmatpush2.msra.mxu0 0.0
        %785 = vmatprep.subr.mxu0 0.0
        %786 = vmatpush2.msra.mxu0 0.0
        %787 = vmatprep.subr.mxu0 0.0
        %788 = vmatpush2.msra.mxu0 0.0
        %789 = vmatprep.subr.mxu0 0.0
        %790 = vmatpush2.msra.mxu0 0.0
        %791 = vmatprep.subr.mxu0 0.0
        %792 = vmatpush2.msra.mxu0 0.0
        %793 = vmatprep.mubr.f32.mxu0 0.0
        %794 = vmatmul.mubr.f32.gmra.mxu0 %v727
        %v795 = vpop.f32.mrf.mxu0
        %v796 = vadd.f32 %v419, %v795
        %v797 = vpop.f32.mrf.mxu0
        %798 = vdwg.mxu0
        %v799 = vmax.f32 %v796, 0.0
        %v800 = vadd.f32 %v679, %v799
        %v801 = vmul.f32 %v421, 3.0
        %vm802 = vcmask 31744
        %v804 = vsel %vm802, %v800, 0
        %vm806 = vcmask 1043456
        %v808 = vsel %vm806, %v420, 0
        %810 = vmatprep.subr.mxu0 0.0
        %811 = vmatpush1.msra.mxu0 0.0
        %812 = vmatprep.subr.mxu0 0.0
        %813 = vmatpush1.msra.mxu0 0.0
        %814 = vmatprep.subr.mxu0 0.0
        %815 = vmatpush1.msra.mxu0 0.0
        %816 = vmatprep.subr.mxu0 0.0
        %817 = vmatpush1.msra.mxu0 0.0
        %818 = vmatprep.subr.mxu0 0.0
        %819 = vmatpush1.msra.mxu0 0.0
        %820 = vmatprep.subr.mxu0 0.0
        %821 = vmatpush1.msra.mxu0 0.0
        %822 = vmatprep.subr.mxu0 0.0
        %823 = vmatpush1.msra.mxu0 0.0
        %824 = vmatprep.subr.mxu0 0.0
        %825 = vmatpush1.msra.mxu0 0.0
        %826 = vmatprep.subr.mxu0 0.0
        %827 = vmatpush1.msra.mxu0 0.0
        %828 = vmatprep.subr.mxu0 0.0
        %829 = vmatpush1.msra.mxu0 0.0
        %830 = vmatprep.subr.mxu0 0.0
        %831 = vmatpush1.msra.mxu0 0.0
        %832 = vmatprep.subr.mxu0 0.0
        %833 = vmatpush1.msra.mxu0 0.0
        %834 = vmatprep.subr.mxu0 0.0
        %835 = vmatpush1.msra.mxu0 0.0
        %836 = vmatprep.subr.mxu0 0.0
        %837 = vmatpush1.msra.mxu0 0.0
        %838 = vmatprep.subr.mxu0 0.0
        %839 = vmatpush1.msra.mxu0 0.0
        %840 = vmatprep.subr.mxu0 0.0
        %841 = vmatpush1.msra.mxu0 %v808
        %842 = vmatprep.subr.mxu0 0.0
        %843 = vmatpush2.msra.mxu0 0.0
        %844 = vmatprep.subr.mxu0 0.0
        %845 = vmatpush2.msra.mxu0 0.0
        %846 = vmatprep.subr.mxu0 0.0
        %847 = vmatpush2.msra.mxu0 0.0
        %848 = vmatprep.subr.mxu0 0.0
        %849 = vmatpush2.msra.mxu0 0.0
        %850 = vmatprep.subr.mxu0 0.0
        %851 = vmatpush2.msra.mxu0 0.0
        %852 = vmatprep.subr.mxu0 0.0
        %853 = vmatpush2.msra.mxu0 0.0
        %854 = vmatprep.subr.mxu0 0.0
        %855 = vmatpush2.msra.mxu0 0.0
        %856 = vmatprep.subr.mxu0 0.0
        %857 = vmatpush2.msra.mxu0 0.0
        %858 = vmatprep.subr.mxu0 0.0
        %859 = vmatpush2.msra.mxu0 0.0
        %860 = vmatprep.subr.mxu0 0.0
        %861 = vmatpush2.msra.mxu0 0.0
        %862 = vmatprep.subr.mxu0 0.0
        %863 = vmatpush2.msra.mxu0 0.0
        %864 = vmatprep.subr.mxu0 0.0
        %865 = vmatpush2.msra.mxu0 0.0
        %866 = vmatprep.subr.mxu0 0.0
        %867 = vmatpush2.msra.mxu0 0.0
        %868 = vmatprep.subr.mxu0 0.0
        %869 = vmatpush2.msra.mxu0 0.0
        %870 = vmatprep.subr.mxu0 0.0
        %871 = vmatpush2.msra.mxu0 0.0
        %872 = vmatprep.subr.mxu0 0.0
        %873 = vmatpush2.msra.mxu0 0.0
        %874 = vmatprep.mubr.f32.mxu0 0.0
        %875 = vmatmul.mubr.f32.gmra.mxu0 %v804
        %v876 = vpop.f32.mrf.mxu0
        %v877 = vadd.f32 %v801, %v876
        %v878 = vpop.f32.mrf.mxu0
        %879 = vdwg.mxu0
        %v880 = vxor.u32 %v877, 2147483648
        %v881 = vmul.f32 %v880, 1.442695
        %v882 = vpow.pop %v881
        %v883 = vadd.f32 %v882, 1.0
        %v884 = vrcp.pop %v883
        %v885 = vmul.f32 1.0, %v884
        %v886 = vlaneseq
        %v887 = vshrl.u32 %v886, 7
        %v888 = vsub.s32 0, %v887
        %v889 = vrot.slane %v885, %v888
        %891 = vbcast.lane.b32.xlu0 %v889, 256
        %v892 = vpop.permute.xlu0 %891
        %s894 = sor.u32 256, 8
        %895 = vbcast.lane.b32.xlu0 %v889, %s894
        %v896 = vpop.permute.xlu0 %895
        %s898 = sor.u32 256, 16
        %899 = vbcast.lane.b32.xlu0 %v889, %s898
        %v900 = vpop.permute.xlu0 %899
        %s902 = sor.u32 256, 24
        %903 = vbcast.lane.b32.xlu0 %v889, %s902
        %v904 = vpop.permute.xlu0 %903
        %s906 = sor.u32 256, 32
        %907 = vbcast.lane.b32.xlu0 %v889, %s906
        %v908 = vpop.permute.xlu0 %907
        %s910 = sor.u32 256, 40
        %911 = vbcast.lane.b32.xlu0 %v889, %s910
        %v912 = vpop.permute.xlu0 %911
        %s914 = sor.u32 256, 48
        %915 = vbcast.lane.b32.xlu0 %v889, %s914
        %v916 = vpop.permute.xlu0 %915
        %s918 = sor.u32 256, 56
        %919 = vbcast.lane.b32.xlu0 %v889, %s918
        %v920 = vpop.permute.xlu0 %919
        %v921 = vmul.f32 %v243, %v892
        %v922 = vmul.f32 %v244, %v892
        %v923 = vmul.f32 %v245, %v896
        %v924 = vmul.f32 %v246, %v896
        %v925 = vmul.f32 %v247, %v900
        %v926 = vmul.f32 %v248, %v900
        %v927 = vmul.f32 %v249, %v904
        %v928 = vmul.f32 %v250, %v904
        %v929 = vmul.f32 %v251, %v908
        %v930 = vmul.f32 %v252, %v908
        %v931 = vmul.f32 %v253, %v912
        %v932 = vmul.f32 %v254, %v912
        %v933 = vmul.f32 %v255, %v916
        %v934 = vmul.f32 %v256, %v916
        %v935 = vmul.f32 %v257, %v920
        %v936 = vmul.f32 %v258, %v920
        %937 = vst [vmem:[%s242] sm:$0xff] %v921
        %938 = vst [vmem:[%s242 + $0x8] sm:$0xff] %v922
        %939 = vst [vmem:[%s242 + $0x10] sm:$0xff] %v923
        %940 = vst [vmem:[%s242 + $0x18] sm:$0xff] %v924
        %941 = vst [vmem:[%s242 + $0x20] sm:$0xff] %v925
        %942 = vst [vmem:[%s242 + $0x28] sm:$0xff] %v926
        %943 = vst [vmem:[%s242 + $0x30] sm:$0xff] %v927
        %944 = vst [vmem:[%s242 + $0x38] sm:$0xff] %v928
        %945 = vst [vmem:[%s242 + $0x40] sm:$0xff] %v929
        %946 = vst [vmem:[%s242 + $0x48] sm:$0xff] %v930
        %947 = vst [vmem:[%s242 + $0x50] sm:$0xff] %v931
        %948 = vst [vmem:[%s242 + $0x58] sm:$0xff] %v932
        %949 = vst [vmem:[%s242 + $0x60] sm:$0xff] %v933
        %950 = vst [vmem:[%s242 + $0x68] sm:$0xff] %v934
        %951 = vst [vmem:[%s242 + $0x70] sm:$0xff] %v935
        %952 = vst [vmem:[%s242 + $0x78] sm:$0xff] %v936
        %s953 = sand.u32 %s140, 1
        %s954 = scalar_lea.sflag [#allocation4], %s953
        %s955 = sand.u32 %s140, 1
        %s956 = smul.addr %s955, 128
        %s957 = scalar_lea.vmem [#allocation5], %s956
        // Predicated region
        $region45: #{tpu_custom_call.1} parent=39 // pred_check
          %p958 = pneg %p150
        $region46: #{tpu_custom_call.1} parent=39 // pred_check_branch
          %960 = sbr.rel (%p958) target = $region48
        $region47: #{tpu_custom_call.1} parent=39 // pred_region
          %s962 = ssub.s32 2048, 2048
          %963 = vsyncadd %s954, %s962
          %s964 = smul.addr %s22, 16
          %s965 = smul.addr %s964, 128
          %s966 = scalar_lea.hbm %s5, %s965
          %s967 = sshll.u32 %s957, 4
          %s968 = int_to_ptr.vmem [resolvable:$true] %s967
          %973 = dma.vmem_to_hbm [thread:$0]  %s968, 2048, %s966, %s954, 256, 256, 16
        $region48: #{tpu_custom_call.1} parent=39 // pred_fallthru
          _
      $region40: #{tpu_custom_call.1} parent=5 // pred_fallthru
        _
      %p974 = scmp.le.s32.totalorder 2, %s17
      // Predicated region
      $region49: #{tpu_custom_call.1} parent=5 // pred_check
        %p975 = pneg %p974
      $region50: #{tpu_custom_call.1} parent=5 // pred_check_branch
        %977 = sbr.rel (%p975) target = $region52
      $region51: #{tpu_custom_call.1} parent=5 // pred_region
        %s978 = ssub.s32 %s17, 2
        // Predicated region
        $region53: #{tpu_custom_call.1} parent=51 // pred_check
          %p979 = pneg %p156
        $region54: #{tpu_custom_call.1} parent=51 // pred_check_branch
          %981 = sbr.rel (%p979) target = $region56
        $region55: #{tpu_custom_call.1} parent=51 // pred_region
          %s982 = sand.u32 %s141, 1
          %s983 = scalar_lea.sflag [#allocation4], %s982
          %s984 = sand.u32 %s141, 1
          %s985 = smul.addr %s984, 128
          %s986 = scalar_lea.vmem [#allocation5], %s985
          %987 = dma.done %s983, 2048
        $region56: #{tpu_custom_call.1} parent=51 // pred_fallthru
          _
      $region52: #{tpu_custom_call.1} parent=5 // pred_fallthru
        _
    $region6: #{tpu_custom_call.1} parent=1 // loop_footer
      %s21 = sadd.s32 1, %s17
    $region7: #{tpu_custom_call.1} parent=1 // loop_footer_branch
      %16 = sbr.rel target = $region3
    $region8: #{tpu_custom_call.1} parent=1 // loop_exit
      _
    %988 = vsyncpa [#allocation3], 1
    %s989 = scalar_lea.sflag [#allocation3], 1
    %990 = vsyncpa %s989, 1
    %991 = vsyncpa [#allocation4], 1
    %s992 = scalar_lea.sflag [#allocation4], 1
    %993 = vsyncpa %s992, 1

</llo_original>
